<compile_context>
chip_gen: v6e
topology: v6e:2x2x1
jax: 0.10.0
libtpu: 0.0.40
codegen_flags: <defaults>
</compile_context>

<pallas_src>
import jax
import jax.numpy as jnp
from jax.experimental import pallas as pl
from jax.experimental.pallas import tpu as pltpu

LANES = 128            # lane width (last dim of every block)
SUBLANES = 8           # f32 sublane tile
MAX_BLOCK_ROWS = 2048  # rows per grid step -> 1 MiB f32 blocks (fits default VMEM on all gens)


def _focal_loss_math(x, t, gamma, alpha):
    """Elementwise focal loss on f32 arrays; t is already (1 - targets)."""
    # q = 1 - sigmoid(x), computed without cancellation.
    q = jax.nn.sigmoid(-x)
    # binary_cross_entropy_with_logits (numerically stable form):
    #   ce = max(x, 0) - x*t + log(1 + exp(-|x|))
    ce = jnp.maximum(x, 0.0) - x * t + jnp.log1p(jnp.exp(-jnp.abs(x)))
    g = float(gamma)
    if g == 0.0:
        mod = jnp.ones_like(q)
    elif g.is_integer() and 0.0 < g <= 8.0:
        mod = q
        for _ in range(int(g) - 1):
            mod = mod * q
    else:
        mod = jnp.power(q, g)
    loss = ce * mod
    if alpha >= 0:
        alpha_t = alpha * t + (1.0 - alpha) * (1.0 - t)
        loss = alpha_t * loss
    return loss


def _make_sum_kernel(*, gamma, alpha, has_weights, mask_tail, n_valid,
                     block_rows, blocks_per_split):
    def kernel(*refs):
        if has_weights:
            x_ref, t_ref, w_ref, out_ref, acc_ref = refs
        else:
            x_ref, t_ref, out_ref, acc_ref = refs
        c = pl.program_id(0)   # parallel split (megacore on v7x)
        i = pl.program_id(1)   # sequential reduction axis

        @pl.when(i == 0)
        def _():
            acc_ref[...] = jnp.zeros_like(acc_ref)

        x = x_ref[...].astype(jnp.float32)
        t = 1.0 - t_ref[...].astype(jnp.float32)  # forward does targets = 1 - targets
        loss = _focal_loss_math(x, t, gamma, alpha)
        if has_weights:
            loss = loss * w_ref[...].astype(jnp.float32)
        if mask_tail:
            # Zero out padded / out-of-bounds tail elements of the last block(s).
            blk = c * blocks_per_split + i
            row = jax.lax.broadcasted_iota(jnp.int32, loss.shape, 0)
            lane = jax.lax.broadcasted_iota(jnp.int32, loss.shape, 1)
            flat = (blk * block_rows + row) * LANES + lane
            loss = jnp.where(flat < n_valid, loss, 0.0)

        acc_ref[...] += loss   # pure VPU add; no per-step cross-lane reduce

        @pl.when(i == pl.num_programs(1) - 1)
        def _():
            # Single cross-lane reduction per split; broadcast into the (8,128) block.
            out_ref[...] = jnp.zeros_like(out_ref) + jnp.sum(acc_ref[...])

    return kernel


def _make_elem_kernel(*, gamma, alpha, has_weights):
    def kernel(*refs):
        if has_weights:
            x_ref, t_ref, w_ref, out_ref = refs
        else:
            x_ref, t_ref, out_ref = refs
        x = x_ref[...].astype(jnp.float32)
        t = 1.0 - t_ref[...].astype(jnp.float32)
        loss = _focal_loss_math(x, t, gamma, alpha)
        if has_weights:
            loss = loss * w_ref[...].astype(jnp.float32)
        out_ref[...] = loss
    return kernel


def focal_loss_rpn(inputs, targets, weights=None, avg_factor=None,
                   reduction="mean", gamma=2.0, alpha=0.25, loss_weight=1.0):
    """JAX/Pallas equivalent of mmdet FocalLossRPN.forward."""
    x = inputs.reshape(-1)
    t = targets.reshape(-1)
    n = x.shape[0]
    has_weights = weights is not None
    w = weights.reshape(-1) if has_weights else None

    # Pad (zeros) only to a multiple of 8*128 so the flat array can be viewed as
    # (rows, 128) with rows % 8 == 0.  Padded elements are masked in-kernel on the
    # sum path and sliced off on the 'none' path.  No copy when already aligned.
    tile_elems = SUBLANES * LANES
    n_pad = pl.cdiv(n, tile_elems) * tile_elems
    pad = n_pad - n
    if pad:
        x = jnp.pad(x, (0, pad))
        t = jnp.pad(t, (0, pad))
        if has_weights:
            w = jnp.pad(w, (0, pad))

    rows = n_pad // LANES
    x2 = x.reshape(rows, LANES)
    t2 = t.reshape(rows, LANES)
    w2 = w.reshape(rows, LANES) if has_weights else None

    block_rows = min(MAX_BLOCK_ROWS, rows)
    num_blocks = pl.cdiv(rows, block_rows)

    gamma = float(gamma)
    alpha = float(alpha)

    if reduction == "none":
        kern = _make_elem_kernel(gamma=gamma, alpha=alpha, has_weights=has_weights)
        spec = pl.BlockSpec((block_rows, LANES), lambda i: (i, 0))
        in_specs = [spec, spec] + ([spec] if has_weights else [])
        args = (x2, t2) + ((w2,) if has_weights else ())
        loss2d = pl.pallas_call(
            kern,
            out_shape=jax.ShapeDtypeStruct((rows, LANES), jnp.float32),
            grid_spec=pltpu.PrefetchScalarGridSpec(
                num_scalar_prefetch=0,
                grid=(num_blocks,),
                in_specs=in_specs,
                out_specs=spec,
            ),
            compiler_params=pltpu.CompilerParams(
                dimension_semantics=("parallel",)),
        )(*args)
        loss = loss2d.reshape(-1)[:n].reshape(-1, 1)
        return loss_weight * loss

    if reduction not in ("mean", "sum"):
        raise ValueError(f"unknown reduction {reduction}")
    if reduction == "sum" and avg_factor is not None:
        raise ValueError('avg_factor can not be used with reduction="sum"')

    # Split the reduction into independent partial sums so v7x's two TensorCores can
    # each take half of the blocks; harmless (a size-1/2 outer loop) on v5e/v6e.
    splits = 2 if (num_blocks >= 2 and num_blocks % 2 == 0) else 1
    blocks_per_split = num_blocks // splits
    covered = num_blocks * block_rows * LANES
    mask_tail = covered != n

    kern = _make_sum_kernel(gamma=gamma, alpha=alpha, has_weights=has_weights,
                            mask_tail=mask_tail, n_valid=n,
                            block_rows=block_rows,
                            blocks_per_split=blocks_per_split)
    in_spec = pl.BlockSpec((block_rows, LANES),
                           lambda c, i: (c * blocks_per_split + i, 0))
    in_specs = [in_spec, in_spec] + ([in_spec] if has_weights else [])
    args = (x2, t2) + ((w2,) if has_weights else ())

    partial = pl.pallas_call(
        kern,
        out_shape=jax.ShapeDtypeStruct((splits * SUBLANES, LANES), jnp.float32),
        grid_spec=pltpu.PrefetchScalarGridSpec(
            num_scalar_prefetch=0,
            grid=(splits, blocks_per_split),
            in_specs=in_specs,
            out_specs=pl.BlockSpec((SUBLANES, LANES), lambda c, i: (c, 0)),
            scratch_shapes=[pltpu.VMEM((block_rows, LANES), jnp.float32)],
        ),
        compiler_params=pltpu.CompilerParams(
            dimension_semantics=("parallel", "arbitrary")),
    )(*args)

    # Each (8, 128) output block is filled with its split's partial sum.
    total = jnp.sum(partial.reshape(splits, SUBLANES, LANES)[:, 0, 0])

    if reduction == "sum":
        loss = total
    else:  # mean
        denom = jnp.float32(n) if avg_factor is None else jnp.float32(avg_factor)
        loss = total / denom
    return loss_weight * loss


def _reference(inputs, targets, weights=None, avg_factor=None,
               reduction="mean", gamma=2.0, alpha=0.25, loss_weight=1.0):
    x = inputs.reshape(-1, 1).astype(jnp.float32)
    t = 1.0 - targets.reshape(-1, 1).astype(jnp.float32)
    p = jax.nn.sigmoid(x)
    ce = jnp.maximum(x, 0.0) - x * t + jnp.log1p(jnp.exp(-jnp.abs(x)))
    loss = ce * jnp.power(1.0 - p, gamma)
    if alpha >= 0:
        loss = (alpha * t + (1.0 - alpha) * (1.0 - t)) * loss
    if weights is not None:
        loss = loss * weights.reshape(-1, 1).astype(jnp.float32)
    if reduction == "mean":
        loss = loss.sum() / (loss.size if avg_factor is None else avg_factor)
    elif reduction == "sum":
        loss = loss.sum()
    return loss_weight * loss


if __name__ == "__main__":
    key = jax.random.PRNGKey(0)
    k1, k2, k3, k4, k5 = jax.random.split(key, 5)

    # --- primary small test: RPN cls logits NCHW, reduction='mean' (default) ---
    B, C, H, W = 2, 4, 16, 16
    inputs = jax.random.normal(k1, (B, C, H, W), dtype=jnp.float32)
    targets = (jax.random.uniform(k2, (B, C, H, W)) > 0.5).astype(jnp.float32)

    loss = jax.block_until_ready(focal_loss_rpn(inputs, targets))
    ref = _reference(inputs, targets)
    assert jnp.isfinite(loss), "non-finite loss"
    assert jnp.allclose(loss, ref, rtol=1e-4, atol=1e-6), (loss, ref)

    # --- weights + reduction='sum' (weighted sum kernel variant) ---------------
    weights = jax.random.uniform(k3, (B, C, H, W), dtype=jnp.float32)
    loss_s = jax.block_until_ready(
        focal_loss_rpn(inputs, targets, weights=weights, reduction="sum"))
    ref_s = _reference(inputs, targets, weights=weights, reduction="sum")
    assert jnp.allclose(loss_s, ref_s, rtol=1e-4, atol=1e-4), (loss_s, ref_s)

    # --- reduction='none' (elementwise kernel) ----------------------------------
    loss_n = jax.block_until_ready(focal_loss_rpn(inputs, targets, reduction="none"))
    ref_n = _reference(inputs, targets, reduction="none")
    assert loss_n.shape == (B * C * H * W, 1)
    assert jnp.allclose(loss_n, ref_n, rtol=1e-4, atol=1e-6), "elementwise mismatch"

    # --- ragged size (exercises in-kernel tail masking + avg_factor) ------------
    shp = (2, 3, 15, 17)  # 1530 elements -> padded to 2048, tail masked in-kernel
    x_r = jax.random.normal(k4, shp, dtype=jnp.float32)
    t_r = (jax.random.uniform(k5, shp) > 0.5).astype(jnp.float32)
    loss_r = jax.block_until_ready(focal_loss_rpn(x_r, t_r, avg_factor=123.0))
    ref_r = _reference(x_r, t_r, avg_factor=123.0)
    assert jnp.allclose(loss_r, ref_r, rtol=1e-4, atol=1e-6), (loss_r, ref_r)

    # --- multi-block + 2-way parallel split with a partial (masked) last block --
    shp = (4, 12, 80, 96)  # 368640 elems -> 2880 rows -> 2 blocks of 2048 rows
    x_m = jax.random.normal(k4, shp, dtype=jnp.float32)
    t_m = (jax.random.uniform(k5, shp) > 0.5).astype(jnp.float32)
    loss_m = jax.block_until_ready(focal_loss_rpn(x_m, t_m))
    ref_m = _reference(x_m, t_m)
    assert jnp.allclose(loss_m, ref_m, rtol=1e-4, atol=1e-4), (loss_m, ref_m)

    print("KERNEL_OK")
</pallas_src>

<mosaic_0001>
module attributes {stable_mosaic.version = 11 : i64} {
  func.func @kernel(%arg0: i32, %arg1: i32, %arg2: memref<16x128xf32, #tpu.memory_space<vmem>>, %arg3: memref<16x128xf32, #tpu.memory_space<vmem>>, %arg4: memref<8x128xf32, #tpu.memory_space<vmem>>, %arg5: memref<16x128xf32, #tpu.memory_space<vmem>>) attributes {dimension_semantics = [#tpu.dimension_semantics<parallel>, #tpu.dimension_semantics<arbitrary>], iteration_bounds = array<i64: 1, 1>, scalar_prefetch = 0 : i64, scratch_operands = 1 : i64, tpu.core_type = #tpu.core_type<tc>, window_params = [{transform_indices = @transform_0, window_bounds = array<i64: 16, 128>}, {transform_indices = @transform_1, window_bounds = array<i64: 16, 128>}, {transform_indices = @transform_2, window_bounds = array<i64: 8, 128>}]} {
    %c0_i32 = arith.constant 0 : i32
    %0 = arith.cmpi eq, %arg1, %c0_i32 : i32
    %1 = arith.extui %0 : i1 to i32
    %c0_i32_0 = arith.constant 0 : i32
    %2 = arith.cmpi ne, %1, %c0_i32_0 : i32
    scf.if %2 {
      %cst_17 = arith.constant 0.000000e+00 : f32
      %40 = vector.broadcast %cst_17 : f32 to vector<16x128xf32>
      %c0_18 = arith.constant 0 : index
      %c0_19 = arith.constant 0 : index
      %41 = vector.load %arg5[%c0_18, %c0_19] : memref<16x128xf32, #tpu.memory_space<vmem>>, vector<16x128xf32>
      tpu.vector_store %arg5[%c0_18, %c0_19], %40 {strides = array<i32>} : memref<16x128xf32, #tpu.memory_space<vmem>>, vector<16x128xf32>,
    } else {
    }
    %c0 = arith.constant 0 : index
    %c0_1 = arith.constant 0 : index
    %3 = vector.load %arg2[%c0, %c0_1] : memref<16x128xf32, #tpu.memory_space<vmem>>, vector<16x128xf32>
    %c0_2 = arith.constant 0 : index
    %c0_3 = arith.constant 0 : index
    %4 = vector.load %arg3[%c0_2, %c0_3] : memref<16x128xf32, #tpu.memory_space<vmem>>, vector<16x128xf32>
    %cst = arith.constant 1.000000e+00 : f32
    %5 = vector.broadcast %cst : f32 to vector<16x128xf32>
    %6 = arith.subf %5, %4 : vector<16x128xf32>
    %cst_4 = arith.constant 0.000000e+00 : f32
    %7 = vector.broadcast %cst_4 : f32 to vector<16x128xf32>
    %8 = arith.subf %7, %3 : vector<16x128xf32>
    %9 = arith.negf %8 : vector<16x128xf32>
    %10 = math.exp %9 : vector<16x128xf32>
    %cst_5 = arith.constant 1.000000e+00 : f32
    %11 = vector.broadcast %cst_5 : f32 to vector<16x128xf32>
    %12 = arith.addf %11, %10 : vector<16x128xf32>
    %13 = arith.divf %11, %12 : vector<16x128xf32>
    %cst_6 = arith.constant 0.000000e+00 : f32
    %14 = vector.broadcast %cst_6 : f32 to vector<16x128xf32>
    %15 = arith.maximumf %3, %14 : vector<16x128xf32>
    %16 = arith.mulf %3, %6 : vector<16x128xf32>
    %17 = arith.subf %15, %16 : vector<16x128xf32>
    %18 = math.absf %3 : vector<16x128xf32>
    %cst_7 = arith.constant 0.000000e+00 : f32
    %19 = vector.broadcast %cst_7 : f32 to vector<16x128xf32>
    %20 = arith.subf %19, %18 : vector<16x128xf32>
    %21 = math.exp %20 : vector<16x128xf32>
    %22 = math.log1p %21 : vector<16x128xf32>
    %23 = arith.addf %17, %22 : vector<16x128xf32>
    %24 = arith.mulf %13, %13 : vector<16x128xf32>
    %25 = arith.mulf %23, %24 : vector<16x128xf32>
    %cst_8 = arith.constant 2.500000e-01 : f32
    %26 = vector.broadcast %cst_8 : f32 to vector<16x128xf32>
    %27 = arith.mulf %26, %6 : vector<16x128xf32>
    %cst_9 = arith.constant 1.000000e+00 : f32
    %28 = vector.broadcast %cst_9 : f32 to vector<16x128xf32>
    %29 = arith.subf %28, %6 : vector<16x128xf32>
    %cst_10 = arith.constant 7.500000e-01 : f32
    %30 = vector.broadcast %cst_10 : f32 to vector<16x128xf32>
    %31 = arith.mulf %30, %29 : vector<16x128xf32>
    %32 = arith.addf %27, %31 : vector<16x128xf32>
    %33 = arith.mulf %32, %25 : vector<16x128xf32>
    %c0_11 = arith.constant 0 : index
    %c0_12 = arith.constant 0 : index
    %34 = vector.load %arg5[%c0_11, %c0_12] : memref<16x128xf32, #tpu.memory_space<vmem>>, vector<16x128xf32>
    %35 = arith.addf %34, %33 : vector<16x128xf32>
    %c0_13 = arith.constant 0 : index
    %c0_14 = arith.constant 0 : index
    %36 = vector.load %arg5[%c0_13, %c0_14] : memref<16x128xf32, #tpu.memory_space<vmem>>, vector<16x128xf32>
    tpu.vector_store %arg5[%c0_13, %c0_14], %35 {strides = array<i32>} : memref<16x128xf32, #tpu.memory_space<vmem>>, vector<16x128xf32>,
    %c0_i32_15 = arith.constant 0 : i32
    %37 = arith.cmpi eq, %arg1, %c0_i32_15 : i32
    %38 = arith.extui %37 : i1 to i32
    %c0_i32_16 = arith.constant 0 : i32
    %39 = arith.cmpi ne, %38, %c0_i32_16 : i32
    scf.if %39 {
      %cst_17 = arith.constant 0.000000e+00 : f32
      %40 = vector.broadcast %cst_17 : f32 to vector<8x128xf32>
      %c0_18 = arith.constant 0 : index
      %c0_19 = arith.constant 0 : index
      %41 = vector.load %arg5[%c0_18, %c0_19] : memref<16x128xf32, #tpu.memory_space<vmem>>, vector<16x128xf32>
      %42 = vector.shape_cast %41 : vector<16x128xf32> to vector<1x16x128xf32>
      %cst_20 = arith.constant dense<0.000000e+00> : vector<1xf32>
      %43 = vector.multi_reduction <add>, %42, %cst_20 [1, 2] : vector<1x16x128xf32> to vector<1xf32>
      %44 = vector.shape_cast %43 : vector<1xf32> to vector<1x1x1xf32>
      %45 = vector.extract %44[0, 0, 0] : f32 from vector<1x1x1xf32>
      %46 = vector.broadcast %45 : f32 to vector<8x128xf32>
      %47 = arith.addf %40, %46 : vector<8x128xf32>
      %c0_21 = arith.constant 0 : index
      %c0_22 = arith.constant 0 : index
      %48 = vector.load %arg4[%c0_21, %c0_22] : memref<8x128xf32, #tpu.memory_space<vmem>>, vector<8x128xf32>
      tpu.vector_store %arg4[%c0_21, %c0_22], %47 {strides = array<i32>} : memref<8x128xf32, #tpu.memory_space<vmem>>, vector<8x128xf32>,
    } else {
    }
    return
  }
  func.func @transform_0(%arg0: i32, %arg1: i32) -> (i32, i32) {
    %c1_i32 = arith.constant 1 : i32
    %0 = arith.muli %arg0, %c1_i32 : i32
    %1 = arith.addi %0, %arg1 : i32
    %c0_i32 = arith.constant 0 : i32
    %c0_i32_0 = arith.constant 0 : i32
    return %1, %c0_i32 : i32, i32
  }
  func.func @transform_1(%arg0: i32, %arg1: i32) -> (i32, i32) {
    %c1_i32 = arith.constant 1 : i32
    %0 = arith.muli %arg0, %c1_i32 : i32
    %1 = arith.addi %0, %arg1 : i32
    %c0_i32 = arith.constant 0 : i32
    %c0_i32_0 = arith.constant 0 : i32
    return %1, %c0_i32 : i32, i32
  }
  func.func @transform_2(%arg0: i32, %arg1: i32) -> (i32, i32) {
    %c0_i32 = arith.constant 0 : i32
    %c0_i32_0 = arith.constant 0 : i32
    return %arg0, %c0_i32 : i32, i32
  }
}

</mosaic_0001>

<llo_original>
// kernel: tpu_custom_call.1
$region0: #{tpu_custom_call.1}
  #allocation0 [shape = 'u32[]', space=smem, size = 0x4, offset = 0x4, fixed_abs, tag = 'smem constant byte address 0x4 - core index']
  #allocation1 [shape = 'u32[144,128]{1,0:T(1,128)}', space=vmem, size = 0x12000, scoped, tag = 'internal scratch']
  #allocation2 [shape = 'f32[16,128]{1,0:T(8,128)}', space=vmem, size = 0x2000, scoped, tag = 'scratch operand']
  %s0 = inlined_call_operand.hbm [shape: f32[16,128], index: 0, kind: input, shape index: {}]
  %s1 = inlined_call_operand.hbm [shape: f32[16,128], index: 1, kind: input, shape index: {}]
  %s2 = inlined_call_operand.hbm [shape: f32[8,128], index: 2, kind: output, shape index: {}]
  %s3 = sld [smem:[#allocation0]]
  $region34: #{tpu_custom_call.1} parent=0
    _
  %s5 = ssub.s32 1, %s3
  %s6 = scalar_select 0, %s5, %s3
  $region1: #{tpu_custom_call.1} parent=0
    #allocation3 [shape = 'u8[8192]{0}', space=vmem, size = 0x2000, scoped, tag = 'input window, operand 0, single buffered']
    #allocation4 [shape = 's32[1]{0}', space=sflag, size = 0x4, scoped, tag = 'scoped memory for tpu_custom_call.1']
    #allocation5 [shape = 's32[1]{0}', space=sflag, size = 0x4, scoped, tag = 'scoped memory for tpu_custom_call.1']
    #allocation6 [shape = 'u8[8192]{0}', space=vmem, size = 0x2000, scoped, tag = 'input window, operand 1, single buffered']
    #allocation7 [shape = 's32[1]{0}', space=sflag, size = 0x4, scoped, tag = 'scoped memory for tpu_custom_call.1']
    #allocation8 [shape = 'u8[4096]{0}', space=vmem, size = 0x1000, scoped, tag = 'output window, operand 0, single buffered']
    %7 = vsyncpa [#allocation4], 0
    %8 = vsyncpa [#allocation7], 0
    %9 = vsyncpa [#allocation5], 0
    // Predicated region
    $region2: #{tpu_custom_call.1} parent=1 // pred_check
      _
    $region3: #{tpu_custom_call.1} parent=1 // pred_check_branch
      %11 = sbr.rel (0) target = $region5
    $region4: #{tpu_custom_call.1} parent=1 // pred_region
      %s12 = sadd.s32 0, 0
      %s13 = smul.u32 2, %s12
      %s15 = ssub.s32 256, 256
      %16 = vsyncadd [#allocation4], %s15
      %s17 = smul.addr %s13, 128
      %s18 = scalar_lea.hbm %s0, %s17
      %s19 = sshll.u32 [#allocation3], 4
      %s20 = int_to_ptr.vmem [resolvable:$true] %s19
      %25 = dma.hbm_to_vmem [thread:$0]  %s18, 256, %s20, [#allocation4], 128, 128, 8
    $region5: #{tpu_custom_call.1} parent=1 // pred_fallthru
      _
    // Predicated region
    $region6: #{tpu_custom_call.1} parent=1 // pred_check
      _
    $region7: #{tpu_custom_call.1} parent=1 // pred_check_branch
      %27 = sbr.rel (0) target = $region9
    $region8: #{tpu_custom_call.1} parent=1 // pred_region
      %s28 = sadd.s32 0, 0
      %s29 = smul.u32 2, %s28
      %s31 = ssub.s32 256, 256
      %32 = vsyncadd [#allocation7], %s31
      %s33 = smul.addr %s29, 128
      %s34 = scalar_lea.hbm %s1, %s33
      %s35 = sshll.u32 [#allocation6], 4
      %s36 = int_to_ptr.vmem [resolvable:$true] %s35
      %41 = dma.hbm_to_vmem [thread:$0]  %s34, 256, %s36, [#allocation7], 128, 128, 8
    $region9: #{tpu_custom_call.1} parent=1 // pred_fallthru
      _
    // Predicated region
    $region10: #{tpu_custom_call.1} parent=1 // pred_check
      _
    $region11: #{tpu_custom_call.1} parent=1 // pred_check_branch
      %43 = sbr.rel (0) target = $region13
    $region12: #{tpu_custom_call.1} parent=1 // pred_region
      %44 = dma.done [#allocation4], 256
    $region13: #{tpu_custom_call.1} parent=1 // pred_fallthru
      _
    // Predicated region
    $region14: #{tpu_custom_call.1} parent=1 // pred_check
      _
    $region15: #{tpu_custom_call.1} parent=1 // pred_check_branch
      %46 = sbr.rel (0) target = $region17
    $region16: #{tpu_custom_call.1} parent=1 // pred_region
      %47 = dma.done [#allocation7], 256
    $region17: #{tpu_custom_call.1} parent=1 // pred_fallthru
      _
    %s48 = sadd.s32 0, 0
    %s49 = smul.u32 2, %s48
    %s50 = sadd.s32 0, 0
    %s51 = smul.u32 2, %s50
    %p52 = scmp.eq.s32.totalorder 0, 0
    // Predicated region
    $region18: #{tpu_custom_call.1} parent=1 // pred_check
      %p53 = pneg %p52
    $region19: #{tpu_custom_call.1} parent=1 // pred_check_branch
      %55 = sbr.rel (%p53) target = $region21
    $region20: #{tpu_custom_call.1} parent=1 // pred_region
      %56 = vst [vmem:[#allocation2] sm:$0xff] 0.0
      %57 = vst [vmem:[#allocation2 + $0x8] sm:$0xff] 0.0
    $region21: #{tpu_custom_call.1} parent=1 // pred_fallthru
      _
    %v58 = vld [vmem:[#allocation3] sm:$0xff]
    %v59 = vld [vmem:[#allocation3 + $0x8] sm:$0xff]
    %v60 = vld [vmem:[#allocation6] sm:$0xff]
    %v61 = vld [vmem:[#allocation6 + $0x8] sm:$0xff]
    %v62 = vsub.f32 1.0, %v60
    %v63 = vsub.f32 1.0, %v61
    %v64 = vsub.f32 0.0, %v58
    %v65 = vsub.f32 0.0, %v59
    %v66 = vxor.u32 %v64, 2147483648
    %v67 = vxor.u32 %v65, 2147483648
    %v68 = vmul.f32 %v66, 1.442695
    %v69 = vpow.pop %v68
    %v70 = vmul.f32 %v67, 1.442695
    %v71 = vpow.pop %v70
    %v72 = vadd.f32 %v69, 1.0
    %v73 = vadd.f32 %v71, 1.0
    %v74 = vrcp.pop %v72
    %v75 = vmul.f32 1.0, %v74
    %v76 = vrcp.pop %v73
    %v77 = vmul.f32 1.0, %v76
    %v78 = vmax.f32 %v58, 0.0
    %v79 = vmax.f32 %v59, 0.0
    %v80 = vmul.f32 %v58, %v62
    %v81 = vmul.f32 %v59, %v63
    %v82 = vsub.f32 %v78, %v80
    %v83 = vsub.f32 %v79, %v81
    %v84 = vand.u32 2147483647, %v58
    %v85 = vand.u32 2147483647, %v59
    %v86 = vsub.f32 0.0, %v84
    %v87 = vsub.f32 0.0, %v85
    %v88 = vmul.f32 %v86, 1.442695
    %v89 = vpow.pop %v88
    %v90 = vmul.f32 %v87, 1.442695
    %v91 = vpow.pop %v90
    %v92 = vadd.f32 %v89, 1.0
    %v93 = vlog2.pop %v92
    %v94 = vmul.f32 %v93, 0.6931472
    %v95 = vmul.f32 -0.5, %v89
    %v96 = vadd.f32 %v95, 1.0
    %v97 = vmul.f32 %v96, %v89
    %v98 = vand.u32 2147483647, %v89
    %vm99 = vcmp.lt.f32.partialorder %v98, 0.0004427343
    %v100 = vsel %vm99, %v97, %v94
    %v101 = vadd.f32 %v91, 1.0
    %v102 = vlog2.pop %v101
    %v103 = vmul.f32 %v102, 0.6931472
    %v104 = vmul.f32 -0.5, %v91
    %v105 = vadd.f32 %v104, 1.0
    %v106 = vmul.f32 %v105, %v91
    %v107 = vand.u32 2147483647, %v91
    %vm108 = vcmp.lt.f32.partialorder %v107, 0.0004427343
    %v109 = vsel %vm108, %v106, %v103
    %v110 = vadd.f32 %v82, %v100
    %v111 = vadd.f32 %v83, %v109
    %v112 = vmul.f32 %v75, %v75
    %v113 = vmul.f32 %v77, %v77
    %v114 = vmul.f32 %v110, %v112
    %v115 = vmul.f32 %v111, %v113
    %v116 = vmul.f32 %v62, 0.25
    %v117 = vmul.f32 %v63, 0.25
    %v118 = vsub.f32 1.0, %v62
    %v119 = vsub.f32 1.0, %v63
    %v120 = vmul.f32 %v118, 0.75
    %v121 = vmul.f32 %v119, 0.75
    %v122 = vadd.f32 %v116, %v120
    %v123 = vadd.f32 %v117, %v121
    %v124 = vmul.f32 %v122, %v114
    %v125 = vmul.f32 %v123, %v115
    %v126 = vld [vmem:[#allocation2] sm:$0xff]
    %v127 = vld [vmem:[#allocation2 + $0x8] sm:$0xff]
    %v128 = vadd.f32 %v126, %v124
    %v129 = vadd.f32 %v127, %v125
    %130 = vst [vmem:[#allocation2] sm:$0xff] %v128
    %131 = vst [vmem:[#allocation2 + $0x8] sm:$0xff] %v129
    // Predicated region
    $region22: #{tpu_custom_call.1} parent=1 // pred_check
      %p132 = pneg %p52
    $region23: #{tpu_custom_call.1} parent=1 // pred_check_branch
      %134 = sbr.rel (%p132) target = $region25
    $region24: #{tpu_custom_call.1} parent=1 // pred_region
      %v135 = vld [vmem:[#allocation2] sm:$0xff]
      %v136 = vld [vmem:[#allocation2 + $0x8] sm:$0xff]
      %v137 = vadd.f32 %v135, %v136
      %138 = vadd.xlane.f32.xlu0 %v137
      %v139 = vpop.xlane.xlu0 %138
      %v140 = vrot.slane %v139, 4
      %v141 = vadd.f32 %v139, %v140
      %v142 = vrot.slane %v141, 2
      %v143 = vadd.f32 %v141, %v142
      %v144 = vrot.slane %v143, 1
      %v145 = vadd.f32 %v143, %v144
      %s146 = vtos %v145
      %v147 = vstv %s146
      %v148 = vadd.f32 %v147, 0.0
      %149 = vst [vmem:[#allocation8] sm:$0xff] %v148
    $region25: #{tpu_custom_call.1} parent=1 // pred_fallthru
      _
    // Predicated region
    $region26: #{tpu_custom_call.1} parent=1 // pred_check
      _
    $region27: #{tpu_custom_call.1} parent=1 // pred_check_branch
      %151 = sbr.rel (0) target = $region29
    $region28: #{tpu_custom_call.1} parent=1 // pred_region
      %s153 = ssub.s32 128, 128
      %154 = vsyncadd [#allocation5], %s153
      %s156 = sshll.u32 [#allocation8], 4
      %s157 = int_to_ptr.vmem [resolvable:$true] %s156
      %159 = dma.vmem_to_hbm [thread:$0]  %s157, 128, %s2, [#allocation5]
    $region29: #{tpu_custom_call.1} parent=1 // pred_fallthru
      _
    // Predicated region
    $region30: #{tpu_custom_call.1} parent=1 // pred_check
      _
    $region31: #{tpu_custom_call.1} parent=1 // pred_check_branch
      %161 = sbr.rel (0) target = $region33
    $region32: #{tpu_custom_call.1} parent=1 // pred_region
      %162 = dma.done [#allocation5], 128
    $region33: #{tpu_custom_call.1} parent=1 // pred_fallthru
      _
    %163 = vsyncpa [#allocation4], 1
    %164 = vsyncpa [#allocation7], 1
    %165 = vsyncpa [#allocation5], 1

</llo_original>
